<compile_context>
chip_gen: v6e
topology: v6e:2x2x1
jax: 0.10.0
libtpu: 0.0.40
codegen_flags: <defaults>
</compile_context>

<pallas_src>
import functools

import jax
import jax.numpy as jnp
from jax.experimental import pallas as pl
from jax.experimental.pallas import tpu as pltpu


def _softplus(x):
    # numerically-stable softplus = max(x, 0) + log1p(exp(-|x|))
    return jnp.maximum(x, 0.0) + jnp.log1p(jnp.exp(-jnp.abs(x)))


def _round_up(n, m):
    return ((n + m - 1) // m) * m


def game_model_kernel(
    x_ref,
    w1_ref, b1_ref,
    w2_ref, b2_ref,
    w3_ref, b3_ref,
    w4_ref, b4_ref,
    w5_ref, b5_ref,
    max_lv_ref, min_lv_ref,
    out_ref,
    *, activation_dtype, head_pad,
):
    def dense(h, w_ref, b_ref):
        # Matmul operands in the weight dtype (weights are pre-cast in the wrapper,
        # bf16 is MXU-native on v5e/v6e/v7x), f32 accumulation, f32 bias add.
        return (
            jnp.dot(h.astype(w_ref.dtype), w_ref[...],
                    preferred_element_type=jnp.float32)
            + b_ref[...]
        )

    def swish(h32):
        # jax.nn.sigmoid lowers to EUP exp + reciprocal; with activation_dtype=bf16
        # (v6e/v7x) packed vregs roughly halve the EUP/VPU work on this hot path.
        h = h32.astype(activation_dtype)
        return h * jax.nn.sigmoid(h)

    h = swish(dense(x_ref[...], w1_ref, b1_ref))
    h = swish(dense(h, w2_ref, b2_ref))
    h = swish(dense(h, w3_ref, b3_ref))
    h = swish(dense(h, w4_ref, b4_ref))

    # Fused head: one 2*head_pad-wide dot; split at a lane-tile boundary (no
    # intra-vreg column slicing).
    head = dense(h, w5_ref, b5_ref)          # (tm, 2*head_pad), f32
    mean = head[:, :head_pad]
    raw_logvar = head[:, head_pad:]

    max_lv = max_lv_ref[...]                 # (1, head_pad); padded lanes are zeros
    min_lv = min_lv_ref[...]
    logvar = max_lv - _softplus(max_lv - raw_logvar)
    logvar = min_lv + _softplus(logvar - min_lv)

    # Two lane-aligned (multiple-of-128-wide) stores into one output block ->
    # a single lane-dense HBM writeback per grid step.
    out_ref[:, :head_pad] = mean.astype(out_ref.dtype)
    out_ref[:, head_pad:] = jnp.exp(logvar).astype(out_ref.dtype)


def game_model_forward(
    x, params, *, tile_m=2048,
    compute_dtype=jnp.float32, activation_dtype=jnp.float32,
):
    """Game_model forward pass. Returns (mean, exp(logvar)).

    tile_m: batch rows per grid step (sublane-aligned). Per-tile VMEM is tiny even
            at tile_m=2048 with hidden~200, so big tiles amortize the ~0.35us
            per-grid-step overhead; >=2 steps are kept when possible for v7x's 2 TCs.
    compute_dtype: matmul-operand dtype (pass jnp.bfloat16 on v6e/v7x for the
            MXU-native path; accumulation stays f32 either way).
    activation_dtype: dtype of the swish math (bf16 on v6e/v7x halves EUP/VPU work;
            keep f32 on v5e, which has no bf16 VPU/EUP).
    """
    batch, in_dim = x.shape
    out_dim = params["max_logvar"].shape[1]
    head_pad = _round_up(max(out_dim, 1), 128)   # lane-dense head width
    pad = head_pad - out_dim

    # ---- head packing: zero-pad each head to head_pad lanes and fuse into one
    #      (hidden, 2*head_pad) weight / (1, 2*head_pad) bias.  Zero padding (not
    #      +/-inf) keeps softplus/exp finite on the discarded lanes. ----
    w5, b5 = params["w5"], params["b5"]
    w5_packed = jnp.concatenate(
        [jnp.pad(w5[:, :out_dim], ((0, 0), (0, pad))),
         jnp.pad(w5[:, out_dim:], ((0, 0), (0, pad)))], axis=1)
    b5_packed = jnp.concatenate(
        [jnp.pad(b5[:, :out_dim], ((0, 0), (0, pad))),
         jnp.pad(b5[:, out_dim:], ((0, 0), (0, pad)))], axis=1)
    max_lv = jnp.pad(params["max_logvar"], ((0, 0), (0, pad)))
    min_lv = jnp.pad(params["min_logvar"], ((0, 0), (0, pad)))

    # ---- pre-cast weights to the compute dtype in the wrapper (not per grid step
    #      in the kernel); biases stay f32 for the f32 bias add. ----
    if compute_dtype != jnp.float32:
        wcast = lambda w: w.astype(compute_dtype)
    else:
        wcast = lambda w: w
    w1, w2, w3, w4 = (wcast(params["w1"]), wcast(params["w2"]),
                      wcast(params["w3"]), wcast(params["w4"]))
    w5_packed = wcast(w5_packed)

    # ---- batch tiling: no host-side pad; last partial block is masked by Pallas ----
    tm = min(tile_m, batch)
    if tm < batch:
        tm = max(8, (tm // 8) * 8)           # sublane-aligned when actually tiling
    if pl.cdiv(batch, tm) < 2 and batch >= 16:
        # v7x has 2 TensorCores: keep >= 2 "parallel" grid steps when the batch
        # is large enough for two sublane-aligned tiles.
        tm = _round_up(pl.cdiv(batch, 2), 8)
    grid = (pl.cdiv(batch, tm),)

    def tiled(shape):  # activation / output tiles: advance with the grid
        return pl.BlockSpec(shape, lambda i: (i, 0))

    def resident(arr):
        # Constant index_map -> DMA'd once, VMEM-resident across all grid steps.
        # (For hidden >= ~1024 on v7x, consider pipeline_mode=pl.Buffered(1) here.)
        return pl.BlockSpec(arr.shape, lambda i: (0, 0))

    in_specs = [
        tiled((tm, in_dim)),
        resident(w1), resident(params["b1"]),
        resident(w2), resident(params["b2"]),
        resident(w3), resident(params["b3"]),
        resident(w4), resident(params["b4"]),
        resident(w5_packed), resident(b5_packed),
        resident(max_lv), resident(min_lv),
    ]
    out_specs = tiled((tm, 2 * head_pad))

    kernel = functools.partial(
        game_model_kernel, activation_dtype=activation_dtype, head_pad=head_pad)

    packed = pl.pallas_call(
        kernel,
        grid=grid,
        in_specs=in_specs,
        out_specs=out_specs,
        out_shape=jax.ShapeDtypeStruct((batch, 2 * head_pad), jnp.float32),
        compiler_params=pltpu.CompilerParams(
            dimension_semantics=("parallel",),
        ),
    )(
        x,
        w1, params["b1"],
        w2, params["b2"],
        w3, params["b3"],
        w4, params["b4"],
        w5_packed, b5_packed,
        max_lv, min_lv,
    )

    mean = packed[:, :out_dim]
    var = packed[:, head_pad:head_pad + out_dim]
    return mean, var


def init_params(key, state_size, action_size, reward_size, hidden_size):
    in_dim = state_size + action_size
    out_dim = state_size + reward_size

    def linear(key, fan_in, fan_out):
        # PyTorch nn.Linear default init: U(-1/sqrt(fan_in), 1/sqrt(fan_in))
        kw, kb = jax.random.split(key)
        bound = 1.0 / jnp.sqrt(jnp.float32(fan_in))
        w = jax.random.uniform(kw, (fan_in, fan_out), jnp.float32, -bound, bound)
        # Biases kept 2-D (1, fan_out): deterministic (sublane, lane) layout.
        b = jax.random.uniform(kb, (1, fan_out), jnp.float32, -bound, bound)
        return w, b

    keys = jax.random.split(key, 5)
    w1, b1 = linear(keys[0], in_dim, hidden_size)
    w2, b2 = linear(keys[1], hidden_size, hidden_size)
    w3, b3 = linear(keys[2], hidden_size, hidden_size)
    w4, b4 = linear(keys[3], hidden_size, hidden_size)
    w5, b5 = linear(keys[4], hidden_size, out_dim * 2)

    return {
        "w1": w1, "b1": b1,
        "w2": w2, "b2": b2,
        "w3": w3, "b3": b3,
        "w4": w4, "b4": b4,
        "w5": w5, "b5": b5,
        "max_logvar": jnp.ones((1, out_dim), jnp.float32) / 2.0,
        "min_logvar": -jnp.ones((1, out_dim), jnp.float32) * 10.0,
    }


def reference_forward(x, params):
    """Pure-JAX reference of the PyTorch forward pass."""
    out_dim = params["max_logvar"].shape[1]
    h = x
    for i in (1, 2, 3, 4):
        h = h @ params[f"w{i}"] + params[f"b{i}"]
        h = h * jax.nn.sigmoid(h)
    out5 = h @ params["w5"] + params["b5"]
    mean = out5[:, :out_dim]
    logvar = params["max_logvar"] - jax.nn.softplus(params["max_logvar"] - out5[:, out_dim:])
    logvar = params["min_logvar"] + jax.nn.softplus(logvar - params["min_logvar"])
    return mean, jnp.exp(logvar)


if __name__ == "__main__":
    # Small, module-consistent shapes.
    state_size, action_size, reward_size, hidden_size = 5, 3, 1, 32
    in_dim = state_size + action_size

    key = jax.random.PRNGKey(0)
    k_params, k1, k2, k3 = jax.random.split(key, 4)
    params = init_params(k_params, state_size, action_size, reward_size, hidden_size)

    # --- test 1: single-tile f32 path (batch == tile) ---
    x1 = jax.random.normal(k1, (8, in_dim), jnp.float32)
    mean1, var1 = game_model_forward(x1, params)
    jax.block_until_ready((mean1, var1))
    rm1, rv1 = reference_forward(x1, params)
    assert jnp.allclose(mean1, rm1, atol=1e-5, rtol=1e-5)
    assert jnp.allclose(var1, rv1, atol=1e-5, rtol=1e-5)

    # --- test 2: multi-step grid + masked partial last block (batch=20, tile_m=8 -> 3 steps) ---
    x2 = jax.random.normal(k2, (20, in_dim), jnp.float32)
    mean2, var2 = game_model_forward(x2, params, tile_m=8)
    jax.block_until_ready((mean2, var2))
    rm2, rv2 = reference_forward(x2, params)
    assert jnp.allclose(mean2, rm2, atol=1e-5, rtol=1e-5)
    assert jnp.allclose(var2, rv2, atol=1e-5, rtol=1e-5)

    # --- test 3: default tile chooser keeps >= 2 grid steps (batch=20 -> tm=16, 2 steps) ---
    mean3, var3 = game_model_forward(x2, params)
    jax.block_until_ready((mean3, var3))
    assert jnp.allclose(mean3, rm2, atol=1e-5, rtol=1e-5)
    assert jnp.allclose(var3, rv2, atol=1e-5, rtol=1e-5)

    # --- test 4: bf16 matmul-operand + bf16 swish path (loose tolerance, f32 accumulation) ---
    x4 = jax.random.normal(k3, (64, in_dim), jnp.float32)
    mean4, var4 = game_model_forward(
        x4, params, compute_dtype=jnp.bfloat16, activation_dtype=jnp.bfloat16)
    jax.block_until_ready((mean4, var4))
    rm4, rv4 = reference_forward(x4, params)
    assert jnp.allclose(mean4, rm4, atol=5e-2, rtol=2e-1)
    assert jnp.allclose(var4, rv4, atol=5e-2, rtol=2e-1)

    print("KERNEL_OK")
</pallas_src>

<mosaic_0001>
module attributes {stable_mosaic.version = 11 : i64} {
  func.func @game_model_kernel(%arg0: i32, %arg1: memref<8x8xf32, #tpu.memory_space<vmem>>, %arg2: memref<8x32xf32, #tpu.memory_space<vmem>>, %arg3: memref<1x32xf32, #tpu.memory_space<vmem>>, %arg4: memref<32x32xf32, #tpu.memory_space<vmem>>, %arg5: memref<1x32xf32, #tpu.memory_space<vmem>>, %arg6: memref<32x32xf32, #tpu.memory_space<vmem>>, %arg7: memref<1x32xf32, #tpu.memory_space<vmem>>, %arg8: memref<32x32xf32, #tpu.memory_space<vmem>>, %arg9: memref<1x32xf32, #tpu.memory_space<vmem>>, %arg10: memref<32x256xf32, #tpu.memory_space<vmem>>, %arg11: memref<1x256xf32, #tpu.memory_space<vmem>>, %arg12: memref<1x128xf32, #tpu.memory_space<vmem>>, %arg13: memref<1x128xf32, #tpu.memory_space<vmem>>, %arg14: memref<8x256xf32, #tpu.memory_space<vmem>>) attributes {dimension_semantics = [#tpu.dimension_semantics<parallel>], iteration_bounds = array<i64: 1>, scalar_prefetch = 0 : i64, scratch_operands = 0 : i64, tpu.core_type = #tpu.core_type<tc>, window_params = [{transform_indices = @transform_0, window_bounds = array<i64: 8, 8>}, {pipeline_mode = #tpu.pipeline_mode<synchronous>, transform_indices = @transform_1, window_bounds = array<i64: 8, 32>}, {pipeline_mode = #tpu.pipeline_mode<synchronous>, transform_indices = @transform_2, window_bounds = array<i64: 1, 32>}, {pipeline_mode = #tpu.pipeline_mode<synchronous>, transform_indices = @transform_3, window_bounds = array<i64: 32, 32>}, {pipeline_mode = #tpu.pipeline_mode<synchronous>, transform_indices = @transform_4, window_bounds = array<i64: 1, 32>}, {pipeline_mode = #tpu.pipeline_mode<synchronous>, transform_indices = @transform_5, window_bounds = array<i64: 32, 32>}, {pipeline_mode = #tpu.pipeline_mode<synchronous>, transform_indices = @transform_6, window_bounds = array<i64: 1, 32>}, {pipeline_mode = #tpu.pipeline_mode<synchronous>, transform_indices = @transform_7, window_bounds = array<i64: 32, 32>}, {pipeline_mode = #tpu.pipeline_mode<synchronous>, transform_indices = @transform_8, window_bounds = array<i64: 1, 32>}, {pipeline_mode = #tpu.pipeline_mode<synchronous>, transform_indices = @transform_9, window_bounds = array<i64: 32, 256>}, {pipeline_mode = #tpu.pipeline_mode<synchronous>, transform_indices = @transform_10, window_bounds = array<i64: 1, 256>}, {pipeline_mode = #tpu.pipeline_mode<synchronous>, transform_indices = @transform_11, window_bounds = array<i64: 1, 128>}, {pipeline_mode = #tpu.pipeline_mode<synchronous>, transform_indices = @transform_12, window_bounds = array<i64: 1, 128>}, {transform_indices = @transform_13, window_bounds = array<i64: 8, 256>}]} {
    %c0 = arith.constant 0 : index
    %c0_0 = arith.constant 0 : index
    %0 = vector.load %arg1[%c0, %c0_0] : memref<8x8xf32, #tpu.memory_space<vmem>>, vector<8x8xf32>
    %c0_1 = arith.constant 0 : index
    %c0_2 = arith.constant 0 : index
    %1 = vector.load %arg2[%c0_1, %c0_2] : memref<8x32xf32, #tpu.memory_space<vmem>>, vector<8x32xf32>
    %cst = arith.constant dense<0.000000e+00> : vector<8x32xf32>
    %2 = tpu.matmul %0, %1, %cst {dimension_numbers = #tpu.dot_dimension_numbers<[1], [0], [0], [1], [0, 0, 1, 1], [], []>} : vector<8x8xf32>, vector<8x32xf32>, vector<8x32xf32> -> vector<8x32xf32>
    %c0_3 = arith.constant 0 : index
    %c0_4 = arith.constant 0 : index
    %3 = vector.load %arg3[%c0_3, %c0_4] : memref<1x32xf32, #tpu.memory_space<vmem>>, vector<1x32xf32>
    %4 = vector.broadcast %3 : vector<1x32xf32> to vector<8x32xf32>
    %5 = arith.addf %2, %4 : vector<8x32xf32>
    %6 = arith.negf %5 : vector<8x32xf32>
    %7 = math.exp %6 : vector<8x32xf32>
    %cst_5 = arith.constant 1.000000e+00 : f32
    %8 = vector.broadcast %cst_5 : f32 to vector<8x32xf32>
    %9 = arith.addf %8, %7 : vector<8x32xf32>
    %10 = arith.divf %8, %9 : vector<8x32xf32>
    %11 = arith.mulf %5, %10 : vector<8x32xf32>
    %c0_6 = arith.constant 0 : index
    %c0_7 = arith.constant 0 : index
    %12 = vector.load %arg4[%c0_6, %c0_7] : memref<32x32xf32, #tpu.memory_space<vmem>>, vector<32x32xf32>
    %cst_8 = arith.constant dense<0.000000e+00> : vector<8x32xf32>
    %13 = tpu.matmul %11, %12, %cst_8 {dimension_numbers = #tpu.dot_dimension_numbers<[1], [0], [0], [1], [0, 0, 1, 1], [], []>} : vector<8x32xf32>, vector<32x32xf32>, vector<8x32xf32> -> vector<8x32xf32>
    %c0_9 = arith.constant 0 : index
    %c0_10 = arith.constant 0 : index
    %14 = vector.load %arg5[%c0_9, %c0_10] : memref<1x32xf32, #tpu.memory_space<vmem>>, vector<1x32xf32>
    %15 = vector.broadcast %14 : vector<1x32xf32> to vector<8x32xf32>
    %16 = arith.addf %13, %15 : vector<8x32xf32>
    %17 = arith.negf %16 : vector<8x32xf32>
    %18 = math.exp %17 : vector<8x32xf32>
    %cst_11 = arith.constant 1.000000e+00 : f32
    %19 = vector.broadcast %cst_11 : f32 to vector<8x32xf32>
    %20 = arith.addf %19, %18 : vector<8x32xf32>
    %21 = arith.divf %19, %20 : vector<8x32xf32>
    %22 = arith.mulf %16, %21 : vector<8x32xf32>
    %c0_12 = arith.constant 0 : index
    %c0_13 = arith.constant 0 : index
    %23 = vector.load %arg6[%c0_12, %c0_13] : memref<32x32xf32, #tpu.memory_space<vmem>>, vector<32x32xf32>
    %cst_14 = arith.constant dense<0.000000e+00> : vector<8x32xf32>
    %24 = tpu.matmul %22, %23, %cst_14 {dimension_numbers = #tpu.dot_dimension_numbers<[1], [0], [0], [1], [0, 0, 1, 1], [], []>} : vector<8x32xf32>, vector<32x32xf32>, vector<8x32xf32> -> vector<8x32xf32>
    %c0_15 = arith.constant 0 : index
    %c0_16 = arith.constant 0 : index
    %25 = vector.load %arg7[%c0_15, %c0_16] : memref<1x32xf32, #tpu.memory_space<vmem>>, vector<1x32xf32>
    %26 = vector.broadcast %25 : vector<1x32xf32> to vector<8x32xf32>
    %27 = arith.addf %24, %26 : vector<8x32xf32>
    %28 = arith.negf %27 : vector<8x32xf32>
    %29 = math.exp %28 : vector<8x32xf32>
    %cst_17 = arith.constant 1.000000e+00 : f32
    %30 = vector.broadcast %cst_17 : f32 to vector<8x32xf32>
    %31 = arith.addf %30, %29 : vector<8x32xf32>
    %32 = arith.divf %30, %31 : vector<8x32xf32>
    %33 = arith.mulf %27, %32 : vector<8x32xf32>
    %c0_18 = arith.constant 0 : index
    %c0_19 = arith.constant 0 : index
    %34 = vector.load %arg8[%c0_18, %c0_19] : memref<32x32xf32, #tpu.memory_space<vmem>>, vector<32x32xf32>
    %cst_20 = arith.constant dense<0.000000e+00> : vector<8x32xf32>
    %35 = tpu.matmul %33, %34, %cst_20 {dimension_numbers = #tpu.dot_dimension_numbers<[1], [0], [0], [1], [0, 0, 1, 1], [], []>} : vector<8x32xf32>, vector<32x32xf32>, vector<8x32xf32> -> vector<8x32xf32>
    %c0_21 = arith.constant 0 : index
    %c0_22 = arith.constant 0 : index
    %36 = vector.load %arg9[%c0_21, %c0_22] : memref<1x32xf32, #tpu.memory_space<vmem>>, vector<1x32xf32>
    %37 = vector.broadcast %36 : vector<1x32xf32> to vector<8x32xf32>
    %38 = arith.addf %35, %37 : vector<8x32xf32>
    %39 = arith.negf %38 : vector<8x32xf32>
    %40 = math.exp %39 : vector<8x32xf32>
    %cst_23 = arith.constant 1.000000e+00 : f32
    %41 = vector.broadcast %cst_23 : f32 to vector<8x32xf32>
    %42 = arith.addf %41, %40 : vector<8x32xf32>
    %43 = arith.divf %41, %42 : vector<8x32xf32>
    %44 = arith.mulf %38, %43 : vector<8x32xf32>
    %c0_24 = arith.constant 0 : index
    %c0_25 = arith.constant 0 : index
    %45 = vector.load %arg10[%c0_24, %c0_25] : memref<32x256xf32, #tpu.memory_space<vmem>>, vector<32x256xf32>
    %cst_26 = arith.constant dense<0.000000e+00> : vector<8x256xf32>
    %46 = tpu.matmul %44, %45, %cst_26 {dimension_numbers = #tpu.dot_dimension_numbers<[1], [0], [0], [1], [0, 0, 1, 1], [], []>} : vector<8x32xf32>, vector<32x256xf32>, vector<8x256xf32> -> vector<8x256xf32>
    %c0_27 = arith.constant 0 : index
    %c0_28 = arith.constant 0 : index
    %47 = vector.load %arg11[%c0_27, %c0_28] : memref<1x256xf32, #tpu.memory_space<vmem>>, vector<1x256xf32>
    %48 = vector.broadcast %47 : vector<1x256xf32> to vector<8x256xf32>
    %49 = arith.addf %46, %48 : vector<8x256xf32>
    %50 = vector.extract_strided_slice %49 {offsets = [0, 0], sizes = [8, 128], strides = [1, 1]} : vector<8x256xf32> to vector<8x128xf32>
    %51 = vector.extract_strided_slice %49 {offsets = [0, 128], sizes = [8, 128], strides = [1, 1]} : vector<8x256xf32> to vector<8x128xf32>
    %c0_29 = arith.constant 0 : index
    %c0_30 = arith.constant 0 : index
    %52 = vector.load %arg12[%c0_29, %c0_30] : memref<1x128xf32, #tpu.memory_space<vmem>>, vector<1x128xf32>
    %c0_31 = arith.constant 0 : index
    %c0_32 = arith.constant 0 : index
    %53 = vector.load %arg13[%c0_31, %c0_32] : memref<1x128xf32, #tpu.memory_space<vmem>>, vector<1x128xf32>
    %54 = vector.broadcast %52 : vector<1x128xf32> to vector<8x128xf32>
    %55 = arith.subf %54, %51 : vector<8x128xf32>
    %cst_33 = arith.constant 0.000000e+00 : f32
    %56 = vector.broadcast %cst_33 : f32 to vector<8x128xf32>
    %57 = arith.maximumf %55, %56 : vector<8x128xf32>
    %58 = math.absf %55 : vector<8x128xf32>
    %cst_34 = arith.constant 0.000000e+00 : f32
    %59 = vector.broadcast %cst_34 : f32 to vector<8x128xf32>
    %60 = arith.subf %59, %58 : vector<8x128xf32>
    %61 = math.exp %60 : vector<8x128xf32>
    %62 = math.log1p %61 : vector<8x128xf32>
    %63 = arith.addf %57, %62 : vector<8x128xf32>
    %64 = vector.broadcast %52 : vector<1x128xf32> to vector<8x128xf32>
    %65 = arith.subf %64, %63 : vector<8x128xf32>
    %66 = vector.broadcast %53 : vector<1x128xf32> to vector<8x128xf32>
    %67 = arith.subf %65, %66 : vector<8x128xf32>
    %cst_35 = arith.constant 0.000000e+00 : f32
    %68 = vector.broadcast %cst_35 : f32 to vector<8x128xf32>
    %69 = arith.maximumf %67, %68 : vector<8x128xf32>
    %70 = math.absf %67 : vector<8x128xf32>
    %cst_36 = arith.constant 0.000000e+00 : f32
    %71 = vector.broadcast %cst_36 : f32 to vector<8x128xf32>
    %72 = arith.subf %71, %70 : vector<8x128xf32>
    %73 = math.exp %72 : vector<8x128xf32>
    %74 = math.log1p %73 : vector<8x128xf32>
    %75 = arith.addf %69, %74 : vector<8x128xf32>
    %76 = vector.broadcast %53 : vector<1x128xf32> to vector<8x128xf32>
    %77 = arith.addf %76, %75 : vector<8x128xf32>
    %c0_37 = arith.constant 0 : index
    %c0_38 = arith.constant 0 : index
    %78 = vector.load %arg14[%c0_37, %c0_38] : memref<8x256xf32, #tpu.memory_space<vmem>>, vector<8x128xf32>
    tpu.vector_store %arg14[%c0_37, %c0_38], %50 {strides = array<i32>} : memref<8x256xf32, #tpu.memory_space<vmem>>, vector<8x128xf32>,
    %79 = math.exp %77 : vector<8x128xf32>
    %c0_39 = arith.constant 0 : index
    %c128 = arith.constant 128 : index
    %80 = vector.load %arg14[%c0_39, %c128] : memref<8x256xf32, #tpu.memory_space<vmem>>, vector<8x128xf32>
    tpu.vector_store %arg14[%c0_39, %c128], %79 {strides = array<i32>} : memref<8x256xf32, #tpu.memory_space<vmem>>, vector<8x128xf32>,
    return
  }
  func.func @transform_0(%arg0: i32) -> (i32, i32) {
    %c0_i32 = arith.constant 0 : i32
    %c0_i32_0 = arith.constant 0 : i32
    return %arg0, %c0_i32 : i32, i32
  }
  func.func @transform_1(%arg0: i32) -> (i32, i32) {
    %c0_i32 = arith.constant 0 : i32
    %c0_i32_0 = arith.constant 0 : i32
    %c0_i32_1 = arith.constant 0 : i32
    return %c0_i32, %c0_i32_0 : i32, i32
  }
  func.func @transform_2(%arg0: i32) -> (i32, i32) {
    %c0_i32 = arith.constant 0 : i32
    %c0_i32_0 = arith.constant 0 : i32
    %c0_i32_1 = arith.constant 0 : i32
    return %c0_i32, %c0_i32_0 : i32, i32
  }
  func.func @transform_3(%arg0: i32) -> (i32, i32) {
    %c0_i32 = arith.constant 0 : i32
    %c0_i32_0 = arith.constant 0 : i32
    %c0_i32_1 = arith.constant 0 : i32
    return %c0_i32, %c0_i32_0 : i32, i32
  }
  func.func @transform_4(%arg0: i32) -> (i32, i32) {
    %c0_i32 = arith.constant 0 : i32
    %c0_i32_0 = arith.constant 0 : i32
    %c0_i32_1 = arith.constant 0 : i32
    return %c0_i32, %c0_i32_0 : i32, i32
  }
  func.func @transform_5(%arg0: i32) -> (i32, i32) {
    %c0_i32 = arith.constant 0 : i32
    %c0_i32_0 = arith.constant 0 : i32
    %c0_i32_1 = arith.constant 0 : i32
    return %c0_i32, %c0_i32_0 : i32, i32
  }
  func.func @transform_6(%arg0: i32) -> (i32, i32) {
    %c0_i32 = arith.constant 0 : i32
    %c0_i32_0 = arith.constant 0 : i32
    %c0_i32_1 = arith.constant 0 : i32
    return %c0_i32, %c0_i32_0 : i32, i32
  }
  func.func @transform_7(%arg0: i32) -> (i32, i32) {
    %c0_i32 = arith.constant 0 : i32
    %c0_i32_0 = arith.constant 0 : i32
    %c0_i32_1 = arith.constant 0 : i32
    return %c0_i32, %c0_i32_0 : i32, i32
  }
  func.func @transform_8(%arg0: i32) -> (i32, i32) {
    %c0_i32 = arith.constant 0 : i32
    %c0_i32_0 = arith.constant 0 : i32
    %c0_i32_1 = arith.constant 0 : i32
    return %c0_i32, %c0_i32_0 : i32, i32
  }
  func.func @transform_9(%arg0: i32) -> (i32, i32) {
    %c0_i32 = arith.constant 0 : i32
    %c0_i32_0 = arith.constant 0 : i32
    %c0_i32_1 = arith.constant 0 : i32
    return %c0_i32, %c0_i32_0 : i32, i32
  }
  func.func @transform_10(%arg0: i32) -> (i32, i32) {
    %c0_i32 = arith.constant 0 : i32
    %c0_i32_0 = arith.constant 0 : i32
    %c0_i32_1 = arith.constant 0 : i32
    return %c0_i32, %c0_i32_0 : i32, i32
  }
  func.func @transform_11(%arg0: i32) -> (i32, i32) {
    %c0_i32 = arith.constant 0 : i32
    %c0_i32_0 = arith.constant 0 : i32
    %c0_i32_1 = arith.constant 0 : i32
    return %c0_i32, %c0_i32_0 : i32, i32
  }
  func.func @transform_12(%arg0: i32) -> (i32, i32) {
    %c0_i32 = arith.constant 0 : i32
    %c0_i32_0 = arith.constant 0 : i32
    %c0_i32_1 = arith.constant 0 : i32
    return %c0_i32, %c0_i32_0 : i32, i32
  }
  func.func @transform_13(%arg0: i32) -> (i32, i32) {
    %c0_i32 = arith.constant 0 : i32
    %c0_i32_0 = arith.constant 0 : i32
    return %arg0, %c0_i32 : i32, i32
  }
}

</mosaic_0001>

<llo_original>
// kernel: tpu_custom_call.1
$region0: #{tpu_custom_call.1}
  #allocation0 [shape = 'u32[]', space=smem, size = 0x4, offset = 0x4, fixed_abs, tag = 'smem constant byte address 0x4 - core index']
  #allocation1 [shape = 'u32[144,128]{1,0:T(1,128)}', space=vmem, size = 0x12000, scoped, tag = 'internal scratch']
  %s0 = inlined_call_operand.hbm [shape: f32[8,8], index: 0, kind: input, shape index: {}]
  %s1 = inlined_call_operand.hbm [shape: f32[8,32], index: 1, kind: input, shape index: {}]
  %s2 = inlined_call_operand.vmem [shape: f32[1,32], index: 2, kind: input, shape index: {}]
  %s3 = inlined_call_operand.hbm [shape: f32[32,32], index: 3, kind: input, shape index: {}]
  %s4 = inlined_call_operand.vmem [shape: f32[1,32], index: 4, kind: input, shape index: {}]
  %s5 = inlined_call_operand.hbm [shape: f32[32,32], index: 5, kind: input, shape index: {}]
  %s6 = inlined_call_operand.vmem [shape: f32[1,32], index: 6, kind: input, shape index: {}]
  %s7 = inlined_call_operand.hbm [shape: f32[32,32], index: 7, kind: input, shape index: {}]
  %s8 = inlined_call_operand.vmem [shape: f32[1,32], index: 8, kind: input, shape index: {}]
  %s9 = inlined_call_operand.hbm [shape: f32[32,256], index: 9, kind: input, shape index: {}]
  %s10 = inlined_call_operand.vmem [shape: f32[1,256], index: 10, kind: input, shape index: {}]
  %s11 = inlined_call_operand.vmem [shape: f32[1,128], index: 11, kind: input, shape index: {}]
  %s12 = inlined_call_operand.vmem [shape: f32[1,128], index: 12, kind: input, shape index: {}]
  %s13 = inlined_call_operand.hbm [shape: f32[8,256], index: 13, kind: output, shape index: {}]
  %s14 = sld [smem:[#allocation0]]
  $region86: #{tpu_custom_call.1} parent=0
    _
  %s16 = ssub.s32 1, %s14
  %s17 = scalar_select 0, %s16, %s14
  $region1: #{tpu_custom_call.1} parent=0
    #allocation2 [shape = 'u8[4096]{0}', space=vmem, size = 0x1000, scoped, tag = 'input window, operand 0, single buffered']
    #allocation3 [shape = 's32[1]{0}', space=sflag, size = 0x4, scoped, tag = 'scoped memory for tpu_custom_call.1']
    #allocation4 [shape = 's32[1]{0}', space=sflag, size = 0x4, scoped, tag = 'scoped memory for tpu_custom_call.1']
    #allocation5 [shape = 'u8[4096]{0}', space=vmem, size = 0x1000, scoped, tag = 'input window, operand 1, single buffered']
    #allocation6 [shape = 's32[1]{0}', space=sflag, size = 0x4, scoped, tag = 'scoped memory for tpu_custom_call.1']
    #allocation7 [shape = 'u8[16384]{0}', space=vmem, size = 0x4000, scoped, tag = 'input window, operand 3, single buffered']
    #allocation8 [shape = 'u8[16384]{0}', space=vmem, size = 0x4000, scoped, tag = 'input window, operand 5, single buffered']
    #allocation9 [shape = 's32[1]{0}', space=sflag, size = 0x4, scoped, tag = 'scoped memory for tpu_custom_call.1']
    #allocation10 [shape = 'u8[16384]{0}', space=vmem, size = 0x4000, scoped, tag = 'input window, operand 7, single buffered']
    #allocation11 [shape = 'u8[32768]{0}', space=vmem, size = 0x8000, scoped, tag = 'input window, operand 9, single buffered']
    #allocation12 [shape = 's32[1]{0}', space=sflag, size = 0x4, scoped, tag = 'scoped memory for tpu_custom_call.1']
    #allocation13 [shape = 'u8[8192]{0}', space=vmem, size = 0x2000, scoped, tag = 'output window, operand 0, single buffered']
    %18 = vsyncpa [#allocation3], 0
    %19 = vsyncpa [#allocation6], 0
    %20 = vsyncpa [#allocation9], 0
    %21 = vsyncpa [#allocation12], 0
    %22 = vsyncpa [#allocation4], 0
    // Predicated region
    $region2: #{tpu_custom_call.1} parent=1 // pred_check
      _
    $region3: #{tpu_custom_call.1} parent=1 // pred_check_branch
      %24 = sbr.rel (0) target = $region5
    $region4: #{tpu_custom_call.1} parent=1 // pred_region
      %s26 = ssub.s32 128, 128
      %27 = vsyncadd [#allocation3], %s26
      %s29 = sshll.u32 [#allocation2], 4
      %s30 = int_to_ptr.vmem [resolvable:$true] %s29
      %32 = dma.hbm_to_vmem [thread:$0]  %s0, 128, %s30, [#allocation3]
    $region5: #{tpu_custom_call.1} parent=1 // pred_fallthru
      _
    // Predicated region
    $region6: #{tpu_custom_call.1} parent=1 // pred_check
      _
    $region7: #{tpu_custom_call.1} parent=1 // pred_check_branch
      %34 = sbr.rel (0) target = $region9
    $region8: #{tpu_custom_call.1} parent=1 // pred_region
      %s36 = ssub.s32 128, 128
      %37 = vsyncadd [#allocation6], %s36
      %s39 = sshll.u32 [#allocation5], 4
      %s40 = int_to_ptr.vmem [resolvable:$true] %s39
      %42 = dma.hbm_to_vmem [thread:$0]  %s1, 128, %s40, [#allocation6]
    $region9: #{tpu_custom_call.1} parent=1 // pred_fallthru
      _
    // Predicated region
    $region10: #{tpu_custom_call.1} parent=1 // pred_check
      _
    $region11: #{tpu_custom_call.1} parent=1 // pred_check_branch
      %44 = sbr.rel (0) target = $region13
    $region12: #{tpu_custom_call.1} parent=1 // pred_region
      _
    $region13: #{tpu_custom_call.1} parent=1 // pred_fallthru
      _
    // Predicated region
    $region14: #{tpu_custom_call.1} parent=1 // pred_check
      _
    $region15: #{tpu_custom_call.1} parent=1 // pred_check_branch
      %46 = sbr.rel (0) target = $region17
    $region16: #{tpu_custom_call.1} parent=1 // pred_region
      %s48 = ssub.s32 512, 512
      %49 = vsyncadd [#allocation6], %s48
      %s50 = sshll.u32 [#allocation7], 4
      %s51 = int_to_ptr.vmem [resolvable:$true] %s50
      %56 = dma.hbm_to_vmem [thread:$0]  %s3, 512, %s51, [#allocation6], 128, 128, 8
    $region17: #{tpu_custom_call.1} parent=1 // pred_fallthru
      _
    // Predicated region
    $region18: #{tpu_custom_call.1} parent=1 // pred_check
      _
    $region19: #{tpu_custom_call.1} parent=1 // pred_check_branch
      %58 = sbr.rel (0) target = $region21
    $region20: #{tpu_custom_call.1} parent=1 // pred_region
      _
    $region21: #{tpu_custom_call.1} parent=1 // pred_fallthru
      _
    // Predicated region
    $region22: #{tpu_custom_call.1} parent=1 // pred_check
      _
    $region23: #{tpu_custom_call.1} parent=1 // pred_check_branch
      %60 = sbr.rel (0) target = $region25
    $region24: #{tpu_custom_call.1} parent=1 // pred_region
      %s62 = ssub.s32 512, 512
      %63 = vsyncadd [#allocation9], %s62
      %s64 = sshll.u32 [#allocation8], 4
      %s65 = int_to_ptr.vmem [resolvable:$true] %s64
      %70 = dma.hbm_to_vmem [thread:$0]  %s5, 512, %s65, [#allocation9], 128, 128, 8
    $region25: #{tpu_custom_call.1} parent=1 // pred_fallthru
      _
    // Predicated region
    $region26: #{tpu_custom_call.1} parent=1 // pred_check
      _
    $region27: #{tpu_custom_call.1} parent=1 // pred_check_branch
      %72 = sbr.rel (0) target = $region29
    $region28: #{tpu_custom_call.1} parent=1 // pred_region
      _
    $region29: #{tpu_custom_call.1} parent=1 // pred_fallthru
      _
    // Predicated region
    $region30: #{tpu_custom_call.1} parent=1 // pred_check
      _
    $region31: #{tpu_custom_call.1} parent=1 // pred_check_branch
      %74 = sbr.rel (0) target = $region33
    $region32: #{tpu_custom_call.1} parent=1 // pred_region
      %s76 = ssub.s32 512, 512
      %77 = vsyncadd [#allocation9], %s76
      %s78 = sshll.u32 [#allocation10], 4
      %s79 = int_to_ptr.vmem [resolvable:$true] %s78
      %84 = dma.hbm_to_vmem [thread:$0]  %s7, 512, %s79, [#allocation9], 128, 128, 8
    $region33: #{tpu_custom_call.1} parent=1 // pred_fallthru
      _
    // Predicated region
    $region34: #{tpu_custom_call.1} parent=1 // pred_check
      _
    $region35: #{tpu_custom_call.1} parent=1 // pred_check_branch
      %86 = sbr.rel (0) target = $region37
    $region36: #{tpu_custom_call.1} parent=1 // pred_region
      _
    $region37: #{tpu_custom_call.1} parent=1 // pred_fallthru
      _
    // Predicated region
    $region38: #{tpu_custom_call.1} parent=1 // pred_check
      _
    $region39: #{tpu_custom_call.1} parent=1 // pred_check_branch
      %88 = sbr.rel (0) target = $region41
    $region40: #{tpu_custom_call.1} parent=1 // pred_region
      %s90 = ssub.s32 1024, 1024
      %91 = vsyncadd [#allocation12], %s90
      %s92 = sshll.u32 [#allocation11], 4
      %s93 = int_to_ptr.vmem [resolvable:$true] %s92
      %98 = dma.hbm_to_vmem [thread:$0]  %s9, 1024, %s93, [#allocation12], 256, 256, 16
    $region41: #{tpu_custom_call.1} parent=1 // pred_fallthru
      _
    // Predicated region
    $region42: #{tpu_custom_call.1} parent=1 // pred_check
      _
    $region43: #{tpu_custom_call.1} parent=1 // pred_check_branch
      %100 = sbr.rel (0) target = $region45
    $region44: #{tpu_custom_call.1} parent=1 // pred_region
      _
    $region45: #{tpu_custom_call.1} parent=1 // pred_fallthru
      _
    // Predicated region
    $region46: #{tpu_custom_call.1} parent=1 // pred_check
      _
    $region47: #{tpu_custom_call.1} parent=1 // pred_check_branch
      %102 = sbr.rel (0) target = $region49
    $region48: #{tpu_custom_call.1} parent=1 // pred_region
      _
    $region49: #{tpu_custom_call.1} parent=1 // pred_fallthru
      _
    // Predicated region
    $region50: #{tpu_custom_call.1} parent=1 // pred_check
      _
    $region51: #{tpu_custom_call.1} parent=1 // pred_check_branch
      %104 = sbr.rel (0) target = $region53
    $region52: #{tpu_custom_call.1} parent=1 // pred_region
      _
    $region53: #{tpu_custom_call.1} parent=1 // pred_fallthru
      _
    // Predicated region
    $region54: #{tpu_custom_call.1} parent=1 // pred_check
      _
    $region55: #{tpu_custom_call.1} parent=1 // pred_check_branch
      %106 = sbr.rel (0) target = $region57
    $region56: #{tpu_custom_call.1} parent=1 // pred_region
      %107 = dma.done [#allocation3], 128
    $region57: #{tpu_custom_call.1} parent=1 // pred_fallthru
      _
    // Predicated region
    $region58: #{tpu_custom_call.1} parent=1 // pred_check
      _
    $region59: #{tpu_custom_call.1} parent=1 // pred_check_branch
      %109 = sbr.rel (0) target = $region61
    $region60: #{tpu_custom_call.1} parent=1 // pred_region
      %110 = dma.done [#allocation6], 128
    $region61: #{tpu_custom_call.1} parent=1 // pred_fallthru
      _
    // Predicated region
    $region62: #{tpu_custom_call.1} parent=1 // pred_check
      _
    $region63: #{tpu_custom_call.1} parent=1 // pred_check_branch
      %112 = sbr.rel (0) target = $region65
    $region64: #{tpu_custom_call.1} parent=1 // pred_region
      %113 = dma.done [#allocation6], 512
    $region65: #{tpu_custom_call.1} parent=1 // pred_fallthru
      _
    // Predicated region
    $region66: #{tpu_custom_call.1} parent=1 // pred_check
      _
    $region67: #{tpu_custom_call.1} parent=1 // pred_check_branch
      %115 = sbr.rel (0) target = $region69
    $region68: #{tpu_custom_call.1} parent=1 // pred_region
      %116 = dma.done [#allocation9], 512
    $region69: #{tpu_custom_call.1} parent=1 // pred_fallthru
      _
    // Predicated region
    $region70: #{tpu_custom_call.1} parent=1 // pred_check
      _
    $region71: #{tpu_custom_call.1} parent=1 // pred_check_branch
      %118 = sbr.rel (0) target = $region73
    $region72: #{tpu_custom_call.1} parent=1 // pred_region
      %119 = dma.done [#allocation9], 512
    $region73: #{tpu_custom_call.1} parent=1 // pred_fallthru
      _
    // Predicated region
    $region74: #{tpu_custom_call.1} parent=1 // pred_check
      _
    $region75: #{tpu_custom_call.1} parent=1 // pred_check_branch
      %121 = sbr.rel (0) target = $region77
    $region76: #{tpu_custom_call.1} parent=1 // pred_region
      %122 = dma.done [#allocation12], 1024
    $region77: #{tpu_custom_call.1} parent=1 // pred_fallthru
      _
    %v123 = vld [vmem:[#allocation2] sm:$0xff]
    %v124 = vld [vmem:[#allocation5] sm:$0xff]
    %v125 = vld [vmem:[%s2] sm:$0x1]
    %v127 = vlaneseq
    %v128 = vshrl.u32 %v127, 7
    %v129 = vsub.s32 0, %v128
    %v130 = vrot.slane %v125, %v129
    %vm132 = vcmask 64512
    %v134 = vsel %vm132, %v123, 0
    %136 = vmatprep.subr.mxu0 0.0
    %137 = vmatpush1.msra.mxu0 0.0
    %138 = vmatprep.subr.mxu0 0.0
    %139 = vmatpush1.msra.mxu0 0.0
    %140 = vmatprep.subr.mxu0 0.0
    %141 = vmatpush1.msra.mxu0 0.0
    %142 = vmatprep.subr.mxu0 0.0
    %143 = vmatpush1.msra.mxu0 0.0
    %144 = vmatprep.subr.mxu0 0.0
    %145 = vmatpush1.msra.mxu0 0.0
    %146 = vmatprep.subr.mxu0 0.0
    %147 = vmatpush1.msra.mxu0 0.0
    %148 = vmatprep.subr.mxu0 0.0
    %149 = vmatpush1.msra.mxu0 0.0
    %150 = vmatprep.subr.mxu0 0.0
    %151 = vmatpush1.msra.mxu0 0.0
    %152 = vmatprep.subr.mxu0 0.0
    %153 = vmatpush1.msra.mxu0 0.0
    %154 = vmatprep.subr.mxu0 0.0
    %155 = vmatpush1.msra.mxu0 0.0
    %156 = vmatprep.subr.mxu0 0.0
    %157 = vmatpush1.msra.mxu0 0.0
    %158 = vmatprep.subr.mxu0 0.0
    %159 = vmatpush1.msra.mxu0 0.0
    %160 = vmatprep.subr.mxu0 0.0
    %161 = vmatpush1.msra.mxu0 0.0
    %162 = vmatprep.subr.mxu0 0.0
    %163 = vmatpush1.msra.mxu0 0.0
    %164 = vmatprep.subr.mxu0 0.0
    %165 = vmatpush1.msra.mxu0 0.0
    %166 = vmatprep.subr.mxu0 0.0
    %167 = vmatpush1.msra.mxu0 %v124
    %168 = vmatprep.subr.mxu0 0.0
    %169 = vmatpush2.msra.mxu0 0.0
    %170 = vmatprep.subr.mxu0 0.0
    %171 = vmatpush2.msra.mxu0 0.0
    %172 = vmatprep.subr.mxu0 0.0
    %173 = vmatpush2.msra.mxu0 0.0
    %174 = vmatprep.subr.mxu0 0.0
    %175 = vmatpush2.msra.mxu0 0.0
    %176 = vmatprep.subr.mxu0 0.0
    %177 = vmatpush2.msra.mxu0 0.0
    %178 = vmatprep.subr.mxu0 0.0
    %179 = vmatpush2.msra.mxu0 0.0
    %180 = vmatprep.subr.mxu0 0.0
    %181 = vmatpush2.msra.mxu0 0.0
    %182 = vmatprep.subr.mxu0 0.0
    %183 = vmatpush2.msra.mxu0 0.0
    %184 = vmatprep.subr.mxu0 0.0
    %185 = vmatpush2.msra.mxu0 0.0
    %186 = vmatprep.subr.mxu0 0.0
    %187 = vmatpush2.msra.mxu0 0.0
    %188 = vmatprep.subr.mxu0 0.0
    %189 = vmatpush2.msra.mxu0 0.0
    %190 = vmatprep.subr.mxu0 0.0
    %191 = vmatpush2.msra.mxu0 0.0
    %192 = vmatprep.subr.mxu0 0.0
    %193 = vmatpush2.msra.mxu0 0.0
    %194 = vmatprep.subr.mxu0 0.0
    %195 = vmatpush2.msra.mxu0 0.0
    %196 = vmatprep.subr.mxu0 0.0
    %197 = vmatpush2.msra.mxu0 0.0
    %198 = vmatprep.subr.mxu0 0.0
    %199 = vmatpush2.msra.mxu0 0.0
    %200 = vmatprep.mubr.f32.mxu0 0.0
    %201 = vmatmul.mubr.f32.gmra.mxu0 %v134
    %v202 = vpop.f32.mrf.mxu0
    %v203 = vadd.f32 %v130, %v202
    %v204 = vpop.f32.mrf.mxu0
    %205 = vdwg.mxu0
    %v206 = vxor.u32 %v203, 2147483648
    %v207 = vmul.f32 %v206, 1.442695
    %v208 = vpow.pop %v207
    %v209 = vadd.f32 %v208, 1.0
    %v210 = vrcp.pop %v209
    %v211 = vmul.f32 1.0, %v210
    %v212 = vmul.f32 %v203, %v211
    %v213 = vld [vmem:[#allocation7] sm:$0xff]
    %v214 = vld [vmem:[#allocation7 + $0x8] sm:$0xff]
    %v215 = vld [vmem:[#allocation7 + $0x10] sm:$0xff]
    %v216 = vld [vmem:[#allocation7 + $0x18] sm:$0xff]
    %v217 = vld [vmem:[%s4] sm:$0x1]
    %v219 = vlaneseq
    %v220 = vshrl.u32 %v219, 7
    %v221 = vsub.s32 0, %v220
    %v222 = vrot.slane %v217, %v221
    %vm224 = vcmask 261120
    %v226 = vsel %vm224, %v212, 0
    %228 = vmatprep.subr.mxu0 0.0
    %229 = vmatpush1.msra.mxu0 0.0
    %230 = vmatprep.subr.mxu0 0.0
    %231 = vmatpush1.msra.mxu0 0.0
    %232 = vmatprep.subr.mxu0 0.0
    %233 = vmatpush1.msra.mxu0 0.0
    %234 = vmatprep.subr.mxu0 0.0
    %235 = vmatpush1.msra.mxu0 0.0
    %236 = vmatprep.subr.mxu0 0.0
    %237 = vmatpush1.msra.mxu0 0.0
    %238 = vmatprep.subr.mxu0 0.0
    %239 = vmatpush1.msra.mxu0 0.0
    %240 = vmatprep.subr.mxu0 0.0
    %241 = vmatpush1.msra.mxu0 0.0
    %242 = vmatprep.subr.mxu0 0.0
    %243 = vmatpush1.msra.mxu0 0.0
    %244 = vmatprep.subr.mxu0 0.0
    %245 = vmatpush1.msra.mxu0 0.0
    %246 = vmatprep.subr.mxu0 0.0
    %247 = vmatpush1.msra.mxu0 0.0
    %248 = vmatprep.subr.mxu0 0.0
    %249 = vmatpush1.msra.mxu0 0.0
    %250 = vmatprep.subr.mxu0 0.0
    %251 = vmatpush1.msra.mxu0 0.0
    %252 = vmatprep.subr.mxu0 0.0
    %253 = vmatpush1.msra.mxu0 %v216
    %254 = vmatprep.subr.mxu0 0.0
    %255 = vmatpush1.msra.mxu0 %v215
    %256 = vmatprep.subr.mxu0 0.0
    %257 = vmatpush1.msra.mxu0 %v214
    %258 = vmatprep.subr.mxu0 0.0
    %259 = vmatpush1.msra.mxu0 %v213
    %260 = vmatprep.subr.mxu0 0.0
    %261 = vmatpush2.msra.mxu0 0.0
    %262 = vmatprep.subr.mxu0 0.0
    %263 = vmatpush2.msra.mxu0 0.0
    %264 = vmatprep.subr.mxu0 0.0
    %265 = vmatpush2.msra.mxu0 0.0
    %266 = vmatprep.subr.mxu0 0.0
    %267 = vmatpush2.msra.mxu0 0.0
    %268 = vmatprep.subr.mxu0 0.0
    %269 = vmatpush2.msra.mxu0 0.0
    %270 = vmatprep.subr.mxu0 0.0
    %271 = vmatpush2.msra.mxu0 0.0
    %272 = vmatprep.subr.mxu0 0.0
    %273 = vmatpush2.msra.mxu0 0.0
    %274 = vmatprep.subr.mxu0 0.0
    %275 = vmatpush2.msra.mxu0 0.0
    %276 = vmatprep.subr.mxu0 0.0
    %277 = vmatpush2.msra.mxu0 0.0
    %278 = vmatprep.subr.mxu0 0.0
    %279 = vmatpush2.msra.mxu0 0.0
    %280 = vmatprep.subr.mxu0 0.0
    %281 = vmatpush2.msra.mxu0 0.0
    %282 = vmatprep.subr.mxu0 0.0
    %283 = vmatpush2.msra.mxu0 0.0
    %284 = vmatprep.subr.mxu0 0.0
    %285 = vmatpush2.msra.mxu0 0.0
    %286 = vmatprep.subr.mxu0 0.0
    %287 = vmatpush2.msra.mxu0 0.0
    %288 = vmatprep.subr.mxu0 0.0
    %289 = vmatpush2.msra.mxu0 0.0
    %290 = vmatprep.subr.mxu0 0.0
    %291 = vmatpush2.msra.mxu0 0.0
    %292 = vmatprep.mubr.f32.mxu0 0.0
    %293 = vmatmul.mubr.f32.gmra.mxu0 %v226
    %v294 = vpop.f32.mrf.mxu0
    %v295 = vadd.f32 %v222, %v294
    %v296 = vpop.f32.mrf.mxu0
    %297 = vdwg.mxu0
    %v298 = vxor.u32 %v295, 2147483648
    %v299 = vmul.f32 %v298, 1.442695
    %v300 = vpow.pop %v299
    %v301 = vadd.f32 %v300, 1.0
    %v302 = vrcp.pop %v301
    %v303 = vmul.f32 1.0, %v302
    %v304 = vmul.f32 %v295, %v303
    %v305 = vld [vmem:[#allocation8] sm:$0xff]
    %v306 = vld [vmem:[#allocation8 + $0x8] sm:$0xff]
    %v307 = vld [vmem:[#allocation8 + $0x10] sm:$0xff]
    %v308 = vld [vmem:[#allocation8 + $0x18] sm:$0xff]
    %v309 = vld [vmem:[%s6] sm:$0x1]
    %v311 = vlaneseq
    %v312 = vshrl.u32 %v311, 7
    %v313 = vsub.s32 0, %v312
    %v314 = vrot.slane %v309, %v313
    %v317 = vsel %vm224, %v304, 0
    %319 = vmatprep.subr.mxu0 0.0
    %320 = vmatpush1.msra.mxu0 0.0
    %321 = vmatprep.subr.mxu0 0.0
    %322 = vmatpush1.msra.mxu0 0.0
    %323 = vmatprep.subr.mxu0 0.0
    %324 = vmatpush1.msra.mxu0 0.0
    %325 = vmatprep.subr.mxu0 0.0
    %326 = vmatpush1.msra.mxu0 0.0
    %327 = vmatprep.subr.mxu0 0.0
    %328 = vmatpush1.msra.mxu0 0.0
    %329 = vmatprep.subr.mxu0 0.0
    %330 = vmatpush1.msra.mxu0 0.0
    %331 = vmatprep.subr.mxu0 0.0
    %332 = vmatpush1.msra.mxu0 0.0
    %333 = vmatprep.subr.mxu0 0.0
    %334 = vmatpush1.msra.mxu0 0.0
    %335 = vmatprep.subr.mxu0 0.0
    %336 = vmatpush1.msra.mxu0 0.0
    %337 = vmatprep.subr.mxu0 0.0
    %338 = vmatpush1.msra.mxu0 0.0
    %339 = vmatprep.subr.mxu0 0.0
    %340 = vmatpush1.msra.mxu0 0.0
    %341 = vmatprep.subr.mxu0 0.0
    %342 = vmatpush1.msra.mxu0 0.0
    %343 = vmatprep.subr.mxu0 0.0
    %344 = vmatpush1.msra.mxu0 %v308
    %345 = vmatprep.subr.mxu0 0.0
    %346 = vmatpush1.msra.mxu0 %v307
    %347 = vmatprep.subr.mxu0 0.0
    %348 = vmatpush1.msra.mxu0 %v306
    %349 = vmatprep.subr.mxu0 0.0
    %350 = vmatpush1.msra.mxu0 %v305
    %351 = vmatprep.subr.mxu0 0.0
    %352 = vmatpush2.msra.mxu0 0.0
    %353 = vmatprep.subr.mxu0 0.0
    %354 = vmatpush2.msra.mxu0 0.0
    %355 = vmatprep.subr.mxu0 0.0
    %356 = vmatpush2.msra.mxu0 0.0
    %357 = vmatprep.subr.mxu0 0.0
    %358 = vmatpush2.msra.mxu0 0.0
    %359 = vmatprep.subr.mxu0 0.0
    %360 = vmatpush2.msra.mxu0 0.0
    %361 = vmatprep.subr.mxu0 0.0
    %362 = vmatpush2.msra.mxu0 0.0
    %363 = vmatprep.subr.mxu0 0.0
    %364 = vmatpush2.msra.mxu0 0.0
    %365 = vmatprep.subr.mxu0 0.0
    %366 = vmatpush2.msra.mxu0 0.0
    %367 = vmatprep.subr.mxu0 0.0
    %368 = vmatpush2.msra.mxu0 0.0
    %369 = vmatprep.subr.mxu0 0.0
    %370 = vmatpush2.msra.mxu0 0.0
    %371 = vmatprep.subr.mxu0 0.0
    %372 = vmatpush2.msra.mxu0 0.0
    %373 = vmatprep.subr.mxu0 0.0
    %374 = vmatpush2.msra.mxu0 0.0
    %375 = vmatprep.subr.mxu0 0.0
    %376 = vmatpush2.msra.mxu0 0.0
    %377 = vmatprep.subr.mxu0 0.0
    %378 = vmatpush2.msra.mxu0 0.0
    %379 = vmatprep.subr.mxu0 0.0
    %380 = vmatpush2.msra.mxu0 0.0
    %381 = vmatprep.subr.mxu0 0.0
    %382 = vmatpush2.msra.mxu0 0.0
    %383 = vmatprep.mubr.f32.mxu0 0.0
    %384 = vmatmul.mubr.f32.gmra.mxu0 %v317
    %v385 = vpop.f32.mrf.mxu0
    %v386 = vadd.f32 %v314, %v385
    %v387 = vpop.f32.mrf.mxu0
    %388 = vdwg.mxu0
    %v389 = vxor.u32 %v386, 2147483648
    %v390 = vmul.f32 %v389, 1.442695
    %v391 = vpow.pop %v390
    %v392 = vadd.f32 %v391, 1.0
    %v393 = vrcp.pop %v392
    %v394 = vmul.f32 1.0, %v393
    %v395 = vmul.f32 %v386, %v394
    %v396 = vld [vmem:[#allocation10] sm:$0xff]
    %v397 = vld [vmem:[#allocation10 + $0x8] sm:$0xff]
    %v398 = vld [vmem:[#allocation10 + $0x10] sm:$0xff]
    %v399 = vld [vmem:[#allocation10 + $0x18] sm:$0xff]
    %v400 = vld [vmem:[%s8] sm:$0x1]
    %v402 = vlaneseq
    %v403 = vshrl.u32 %v402, 7
    %v404 = vsub.s32 0, %v403
    %v405 = vrot.slane %v400, %v404
    %v408 = vsel %vm224, %v395, 0
    %410 = vmatprep.subr.mxu0 0.0
    %411 = vmatpush1.msra.mxu0 0.0
    %412 = vmatprep.subr.mxu0 0.0
    %413 = vmatpush1.msra.mxu0 0.0
    %414 = vmatprep.subr.mxu0 0.0
    %415 = vmatpush1.msra.mxu0 0.0
    %416 = vmatprep.subr.mxu0 0.0
    %417 = vmatpush1.msra.mxu0 0.0
    %418 = vmatprep.subr.mxu0 0.0
    %419 = vmatpush1.msra.mxu0 0.0
    %420 = vmatprep.subr.mxu0 0.0
    %421 = vmatpush1.msra.mxu0 0.0
    %422 = vmatprep.subr.mxu0 0.0
    %423 = vmatpush1.msra.mxu0 0.0
    %424 = vmatprep.subr.mxu0 0.0
    %425 = vmatpush1.msra.mxu0 0.0
    %426 = vmatprep.subr.mxu0 0.0
    %427 = vmatpush1.msra.mxu0 0.0
    %428 = vmatprep.subr.mxu0 0.0
    %429 = vmatpush1.msra.mxu0 0.0
    %430 = vmatprep.subr.mxu0 0.0
    %431 = vmatpush1.msra.mxu0 0.0
    %432 = vmatprep.subr.mxu0 0.0
    %433 = vmatpush1.msra.mxu0 0.0
    %434 = vmatprep.subr.mxu0 0.0
    %435 = vmatpush1.msra.mxu0 %v399
    %436 = vmatprep.subr.mxu0 0.0
    %437 = vmatpush1.msra.mxu0 %v398
    %438 = vmatprep.subr.mxu0 0.0
    %439 = vmatpush1.msra.mxu0 %v397
    %440 = vmatprep.subr.mxu0 0.0
    %441 = vmatpush1.msra.mxu0 %v396
    %442 = vmatprep.subr.mxu0 0.0
    %443 = vmatpush2.msra.mxu0 0.0
    %444 = vmatprep.subr.mxu0 0.0
    %445 = vmatpush2.msra.mxu0 0.0
    %446 = vmatprep.subr.mxu0 0.0
    %447 = vmatpush2.msra.mxu0 0.0
    %448 = vmatprep.subr.mxu0 0.0
    %449 = vmatpush2.msra.mxu0 0.0
    %450 = vmatprep.subr.mxu0 0.0
    %451 = vmatpush2.msra.mxu0 0.0
    %452 = vmatprep.subr.mxu0 0.0
    %453 = vmatpush2.msra.mxu0 0.0
    %454 = vmatprep.subr.mxu0 0.0
    %455 = vmatpush2.msra.mxu0 0.0
    %456 = vmatprep.subr.mxu0 0.0
    %457 = vmatpush2.msra.mxu0 0.0
    %458 = vmatprep.subr.mxu0 0.0
    %459 = vmatpush2.msra.mxu0 0.0
    %460 = vmatprep.subr.mxu0 0.0
    %461 = vmatpush2.msra.mxu0 0.0
    %462 = vmatprep.subr.mxu0 0.0
    %463 = vmatpush2.msra.mxu0 0.0
    %464 = vmatprep.subr.mxu0 0.0
    %465 = vmatpush2.msra.mxu0 0.0
    %466 = vmatprep.subr.mxu0 0.0
    %467 = vmatpush2.msra.mxu0 0.0
    %468 = vmatprep.subr.mxu0 0.0
    %469 = vmatpush2.msra.mxu0 0.0
    %470 = vmatprep.subr.mxu0 0.0
    %471 = vmatpush2.msra.mxu0 0.0
    %472 = vmatprep.subr.mxu0 0.0
    %473 = vmatpush2.msra.mxu0 0.0
    %474 = vmatprep.mubr.f32.mxu0 0.0
    %475 = vmatmul.mubr.f32.gmra.mxu0 %v408
    %v476 = vpop.f32.mrf.mxu0
    %v477 = vadd.f32 %v405, %v476
    %v478 = vpop.f32.mrf.mxu0
    %479 = vdwg.mxu0
    %v480 = vxor.u32 %v477, 2147483648
    %v481 = vmul.f32 %v480, 1.442695
    %v482 = vpow.pop %v481
    %v483 = vadd.f32 %v482, 1.0
    %v484 = vrcp.pop %v483
    %v485 = vmul.f32 1.0, %v484
    %v486 = vmul.f32 %v477, %v485
    %v487 = vld [vmem:[#allocation11] sm:$0xff]
    %v488 = vld [vmem:[#allocation11 + $0x8] sm:$0xff]
    %v489 = vld [vmem:[#allocation11 + $0x10] sm:$0xff]
    %v490 = vld [vmem:[#allocation11 + $0x18] sm:$0xff]
    %v491 = vld [vmem:[#allocation11 + $0x20] sm:$0xff]
    %v492 = vld [vmem:[#allocation11 + $0x28] sm:$0xff]
    %v493 = vld [vmem:[#allocation11 + $0x30] sm:$0xff]
    %v494 = vld [vmem:[#allocation11 + $0x38] sm:$0xff]
    %v495 = vld [vmem:[%s10] sm:$0x3]
    %v497 = vlaneseq
    %v498 = vshrl.u32 %v497, 7
    %v499 = vsub.s32 0, %v498
    %v500 = vrot.slane %v495, %v499
    %v501 = vlaneseq
    %v502 = vshrl.u32 %v501, 7
    %v503 = vsub.s32 1, %v502
    %v504 = vrot.slane %v495, %v503
    %v508 = vsel %vm224, %v486, 0
    %510 = vmatprep.subr.mxu0 0.0
    %511 = vmatpush1.msra.mxu0 0.0
    %512 = vmatprep.subr.mxu0 0.0
    %513 = vmatpush1.msra.mxu0 0.0
    %514 = vmatprep.subr.mxu0 0.0
    %515 = vmatpush1.msra.mxu0 0.0
    %516 = vmatprep.subr.mxu0 0.0
    %517 = vmatpush1.msra.mxu0 0.0
    %518 = vmatprep.subr.mxu0 0.0
    %519 = vmatpush1.msra.mxu0 0.0
    %520 = vmatprep.subr.mxu0 0.0
    %521 = vmatpush1.msra.mxu0 0.0
    %522 = vmatprep.subr.mxu0 0.0
    %523 = vmatpush1.msra.mxu0 0.0
    %524 = vmatprep.subr.mxu0 0.0
    %525 = vmatpush1.msra.mxu0 0.0
    %526 = vmatprep.subr.mxu0 0.0
    %527 = vmatpush1.msra.mxu0 0.0
    %528 = vmatprep.subr.mxu0 0.0
    %529 = vmatpush1.msra.mxu0 0.0
    %530 = vmatprep.subr.mxu0 0.0
    %531 = vmatpush1.msra.mxu0 0.0
    %532 = vmatprep.subr.mxu0 0.0
    %533 = vmatpush1.msra.mxu0 0.0
    %534 = vmatprep.subr.mxu0 %v494
    %535 = vmatpush1.msra.mxu0 %v493
    %536 = vmatprep.subr.mxu0 %v492
    %537 = vmatpush1.msra.mxu0 %v491
    %538 = vmatprep.subr.mxu0 %v490
    %539 = vmatpush1.msra.mxu0 %v489
    %540 = vmatprep.subr.mxu0 %v488
    %541 = vmatpush1.msra.mxu0 %v487
    %542 = vmatprep.subr.mxu0 0.0
    %543 = vmatpush2.msra.mxu0 0.0
    %544 = vmatprep.subr.mxu0 0.0
    %545 = vmatpush2.msra.mxu0 0.0
    %546 = vmatprep.subr.mxu0 0.0
    %547 = vmatpush2.msra.mxu0 0.0
    %548 = vmatprep.subr.mxu0 0.0
    %549 = vmatpush2.msra.mxu0 0.0
    %550 = vmatprep.subr.mxu0 0.0
    %551 = vmatpush2.msra.mxu0 0.0
    %552 = vmatprep.subr.mxu0 0.0
    %553 = vmatpush2.msra.mxu0 0.0
    %554 = vmatprep.subr.mxu0 0.0
    %555 = vmatpush2.msra.mxu0 0.0
    %556 = vmatprep.subr.mxu0 0.0
    %557 = vmatpush2.msra.mxu0 0.0
    %558 = vmatprep.subr.mxu0 0.0
    %559 = vmatpush2.msra.mxu0 0.0
    %560 = vmatprep.subr.mxu0 0.0
    %561 = vmatpush2.msra.mxu0 0.0
    %562 = vmatprep.subr.mxu0 0.0
    %563 = vmatpush2.msra.mxu0 0.0
    %564 = vmatprep.subr.mxu0 0.0
    %565 = vmatpush2.msra.mxu0 0.0
    %566 = vmatprep.subr.mxu0 0.0
    %567 = vmatpush2.msra.mxu0 0.0
    %568 = vmatprep.subr.mxu0 0.0
    %569 = vmatpush2.msra.mxu0 0.0
    %570 = vmatprep.subr.mxu0 0.0
    %571 = vmatpush2.msra.mxu0 0.0
    %572 = vmatprep.subr.mxu0 0.0
    %573 = vmatpush2.msra.mxu0 0.0
    %574 = vmatprep.mubr.f32.mxu0 0.0
    %575 = vmatmul.mubr.f32.gmra.mxu0 %v508
    %v576 = vpop.f32.mrf.mxu0
    %v577 = vadd.f32 %v500, %v576
    %v578 = vpop.f32.mrf.mxu0
    %v579 = vadd.f32 %v504, %v578
    %580 = vdwg.mxu0
    %v581 = vld [vmem:[%s11] sm:$0x1]
    %v582 = vld [vmem:[%s12] sm:$0x1]
    %v584 = vlaneseq
    %v585 = vshrl.u32 %v584, 7
    %v586 = vsub.s32 0, %v585
    %v587 = vrot.slane %v581, %v586
    %v589 = vsub.f32 %v587, %v579
    %v590 = vmax.f32 %v589, 0.0
    %v591 = vand.u32 2147483647, %v589
    %v592 = vsub.f32 0.0, %v591
    %v593 = vmul.f32 %v592, 1.442695
    %v594 = vpow.pop %v593
    %v595 = vadd.f32 %v594, 1.0
    %v596 = vlog2.pop %v595
    %v597 = vmul.f32 %v596, 0.6931472
    %v598 = vmul.f32 -0.5, %v594
    %v599 = vadd.f32 %v598, 1.0
    %v600 = vmul.f32 %v599, %v594
    %v601 = vand.u32 2147483647, %v594
    %vm602 = vcmp.lt.f32.partialorder %v601, 0.0004427343
    %v603 = vsel %vm602, %v600, %v597
    %v604 = vadd.f32 %v590, %v603
    %v605 = vsub.f32 %v587, %v604
    %v607 = vlaneseq
    %v608 = vshrl.u32 %v607, 7
    %v609 = vsub.s32 0, %v608
    %v610 = vrot.slane %v582, %v609
    %v612 = vsub.f32 %v605, %v610
    %v613 = vmax.f32 %v612, 0.0
    %v614 = vand.u32 2147483647, %v612
    %v615 = vsub.f32 0.0, %v614
    %v616 = vmul.f32 %v615, 1.442695
    %v617 = vpow.pop %v616
    %v618 = vadd.f32 %v617, 1.0
    %v619 = vlog2.pop %v618
    %v620 = vmul.f32 %v619, 0.6931472
    %v621 = vmul.f32 -0.5, %v617
    %v622 = vadd.f32 %v621, 1.0
    %v623 = vmul.f32 %v622, %v617
    %v624 = vand.u32 2147483647, %v617
    %vm625 = vcmp.lt.f32.partialorder %v624, 0.0004427343
    %v626 = vsel %vm625, %v623, %v620
    %v627 = vadd.f32 %v613, %v626
    %v628 = vadd.f32 %v610, %v627
    %629 = vst [vmem:[#allocation13] sm:$0xff] %v577
    %v630 = vmul.f32 %v628, 1.442695
    %v631 = vpow.pop %v630
    %632 = vst [vmem:[#allocation13 + $0x8] sm:$0xff] %v631
    // Predicated region
    $region78: #{tpu_custom_call.1} parent=1 // pred_check
      _
    $region79: #{tpu_custom_call.1} parent=1 // pred_check_branch
      %634 = sbr.rel (0) target = $region81
    $region80: #{tpu_custom_call.1} parent=1 // pred_region
      %s636 = ssub.s32 256, 256
      %637 = vsyncadd [#allocation4], %s636
      %s639 = sshll.u32 [#allocation13], 4
      %s640 = int_to_ptr.vmem [resolvable:$true] %s639
      %642 = dma.vmem_to_hbm [thread:$0]  %s640, 256, %s13, [#allocation4]
    $region81: #{tpu_custom_call.1} parent=1 // pred_fallthru
      _
    // Predicated region
    $region82: #{tpu_custom_call.1} parent=1 // pred_check
      _
    $region83: #{tpu_custom_call.1} parent=1 // pred_check_branch
      %644 = sbr.rel (0) target = $region85
    $region84: #{tpu_custom_call.1} parent=1 // pred_region
      %645 = dma.done [#allocation4], 256
    $region85: #{tpu_custom_call.1} parent=1 // pred_fallthru
      _
    %646 = vsyncpa [#allocation3], 1
    %647 = vsyncpa [#allocation6], 1
    %648 = vsyncpa [#allocation9], 1
    %649 = vsyncpa [#allocation12], 1
    %650 = vsyncpa [#allocation4], 1

</llo_original>
